<compile_context>
chip_gen: v6e
topology: v6e:2x2x1
jax: 0.10.0
libtpu: 0.0.40
codegen_flags: <defaults>
</compile_context>

<pallas_src>
import jax
import jax.numpy as jnp
from jax.experimental import pallas as pl
from jax.experimental.pallas import tpu as pltpu

_VMEM = pl.BlockSpec(memory_space=pltpu.MemorySpace.VMEM)


# ----------------------------------------------------------------------------
# Kernel 1: hidden-independent feature projections (run once per sequence).
# ----------------------------------------------------------------------------
def feature_proj_kernel(feats_ref, wf_ref, we_ref, b_ref, out_ref):
    # feats_ref : (B*L, E)   features, flattened lane-dense in the wrapper
    # wf_ref    : (E, H)     linear_feats 1x1-conv weight
    # we_ref    : (H, H)     embed_feats  1x1-conv weight
    # b_ref     : (1, 2H)    [bf | be]
    # out_ref   : (B*L, 2H)  [feat_h | feat_embed]   (single writeback DMA)
    H = we_ref.shape[0]
    feat_h = jnp.maximum(
        jnp.dot(feats_ref[...], wf_ref[...], preferred_element_type=jnp.float32)
        + b_ref[:, 0:H],
        0.0,
    )
    feat_embed = (
        jnp.dot(feat_h, we_ref[...], preferred_element_type=jnp.float32)
        + b_ref[:, H:2 * H]
    )
    out_ref[:, 0:H] = feat_h
    out_ref[:, H:2 * H] = feat_embed


# ----------------------------------------------------------------------------
# Kernel 2: per-timestep LSTM cell + attention.
# ----------------------------------------------------------------------------
def lstm_att_step_kernel(
    xh_ref,    # (B, 2E+H)    cat(input_feat, prev_word, h0)
    c0_ref,    # (B, H)
    fh_ref,    # (B, L, H)    precomputed ReLU(conv1x1(features))
    fe_ref,    # (B, L, H)    precomputed embed_feats(feat_h)
    wg_ref,    # (2E+H, 4H)   fused [Wih; Whh]
    wa_ref,    # (H, 3H)      [Wlh | Weh | Wout]
    pv_ref,    # (1, 8H+1)    [b_gates(4H) | blh | beh | bout | wc | bc]
    out_ref,   # (B, 3H+L)    [out | h | c | att]
):
    H = c0_ref.shape[1]
    B, L, _ = fh_ref.shape

    pv = pv_ref[...]
    b_gates = pv[:, 0:4 * H]
    blh = pv[:, 4 * H:5 * H]
    beh = pv[:, 5 * H:6 * H]
    bout = pv[:, 6 * H:7 * H]
    wc = pv[:, 7 * H:8 * H]           # att_coeffs conv weight (1 out-channel)
    bc = pv[:, 8 * H:8 * H + 1]       # (1, 1)

    # ---------------- LSTM cell: single fused gate matmul ----------------
    gates = (
        jnp.dot(xh_ref[...], wg_ref[...], preferred_element_type=jnp.float32)
        + b_gates
    )
    i_g = jax.nn.sigmoid(gates[:, 0 * H:1 * H])
    f_g = jax.nn.sigmoid(gates[:, 1 * H:2 * H])
    g_g = jnp.tanh(gates[:, 2 * H:3 * H])
    o_g = jax.nn.sigmoid(gates[:, 3 * H:4 * H])
    c_new = f_g * c0_ref[...] + i_g * g_g
    h_new = o_g * jnp.tanh(c_new)

    # ---------------- Attention (feature branch precomputed) --------------
    hid = jnp.tanh(
        jnp.dot(h_new, wa_ref[:, 0:H], preferred_element_type=jnp.float32) + blh
    )
    hid_embed = (
        jnp.dot(hid, wa_ref[:, H:2 * H], preferred_element_type=jnp.float32) + beh
    )
    merged = jnp.tanh(fe_ref[...] + hid_embed[:, None, :])             # (B, L, H)

    # 1x1 conv with a single output channel == weighted sum over H (tiny)
    logits = jnp.sum(merged * wc.reshape(1, 1, H), axis=-1) + bc       # (B, L)

    # softmax over L
    m = jnp.max(logits, axis=1, keepdims=True)
    e = jnp.exp(logits - m)
    att = e / jnp.sum(e, axis=1, keepdims=True)                        # (B, L)

    # weighted sum of feat_h over L as a batched MXU matmul ('bqk,bkd->bqd', q=1)
    ctx = jnp.einsum(
        "bql,blh->bqh", att[:, None, :], fh_ref[...],
        preferred_element_type=jnp.float32,
    )                                                                  # (B, 1, H)
    v = ctx[:, 0, :] + hid
    out = jnp.tanh(
        jnp.dot(v, wa_ref[:, 2 * H:3 * H], preferred_element_type=jnp.float32)
        + bout
    )

    # single packed output slab -> one writeback DMA
    out_ref[:, 0:H] = out
    out_ref[:, H:2 * H] = h_new
    out_ref[:, 2 * H:3 * H] = c_new
    out_ref[:, 3 * H:3 * H + L] = att


# ----------------------------------------------------------------------------
# Wrappers
# ----------------------------------------------------------------------------
def pack_params(params):
    """One-time packing: fuse the gate matmuls and coalesce small tensors."""
    return {
        "w_gates": jnp.concatenate([params["wih"], params["whh"]], axis=0),
        "w_att": jnp.concatenate(
            [params["wlh"], params["weh"], params["wout"]], axis=1),
        "pv": jnp.concatenate(
            [params["bih"] + params["bhh"], params["blh"], params["beh"],
             params["bout"], params["wc"], params["bc"]], axis=1),
        "wf": params["wf"],
        "we": params["we"],
        "b_feat": jnp.concatenate([params["bf"], params["be"]], axis=1),
    }


def precompute_feature_projections(features_ncl, packed):
    """h-independent branch; in a decode loop, call this once per sequence."""
    B, E, L = features_ncl.shape
    H = packed["we"].shape[0]
    feats_flat = jnp.transpose(features_ncl, (0, 2, 1)).reshape(B * L, E)

    flops = 2 * B * L * E * H + 2 * B * L * H * H
    bytes_acc = 4 * (B * L * E + E * H + H * H + 2 * H + B * L * 2 * H)
    slab = pl.pallas_call(
        feature_proj_kernel,
        out_shape=jax.ShapeDtypeStruct((B * L, 2 * H), jnp.float32),
        in_specs=[_VMEM] * 4,
        out_specs=_VMEM,
        cost_estimate=pl.CostEstimate(
            flops=int(flops), transcendentals=0, bytes_accessed=int(bytes_acc)),
    )(feats_flat, packed["wf"], packed["we"], packed["b_feat"])

    feat_h = slab[:, 0:H].reshape(B, L, H)
    feat_embed = slab[:, H:2 * H].reshape(B, L, H)
    return feat_h, feat_embed


def lstm_att_step(input_feat, prev_word, states, feat_h, feat_embed, packed):
    B = input_feat.shape[0]
    _, L, H = feat_h.shape
    if states is None:
        h0 = jnp.zeros((B, H), input_feat.dtype)
        c0 = jnp.zeros((B, H), input_feat.dtype)
    else:
        h0, c0 = states

    xh = jnp.concatenate([input_feat, prev_word, h0], axis=1)   # (B, 2E+H)
    in_dim = xh.shape[1]

    flops = (2 * B * in_dim * 4 * H + 3 * 2 * B * H * H + 2 * B * L * H
             + 8 * B * L * H + 12 * B * H)
    transc = 7 * B * H + B * L * H + B * L
    in_elems = (xh.size + c0.size + feat_h.size + feat_embed.size
                + packed["w_gates"].size + packed["w_att"].size
                + packed["pv"].size)
    bytes_acc = 4 * (in_elems + B * (3 * H + L))

    slab = pl.pallas_call(
        lstm_att_step_kernel,
        out_shape=jax.ShapeDtypeStruct((B, 3 * H + L), jnp.float32),
        in_specs=[_VMEM] * 7,
        out_specs=_VMEM,
        cost_estimate=pl.CostEstimate(
            flops=int(flops), transcendentals=int(transc),
            bytes_accessed=int(bytes_acc)),
    )(xh, c0, feat_h, feat_embed,
      packed["w_gates"], packed["w_att"], packed["pv"])

    out = slab[:, 0:H]
    h_new = slab[:, H:2 * H]
    c_new = slab[:, 2 * H:3 * H]
    att = slab[:, 3 * H:3 * H + L]
    return out, (h_new, c_new), att


def lstm_att_forward(input_feat, features_ncl, prev_word, states, packed):
    """Matches LSTMAtt.forward for one step (features in PyTorch NCL layout)."""
    feat_h, feat_embed = precompute_feature_projections(features_ncl, packed)
    return lstm_att_step(input_feat, prev_word, states, feat_h, feat_embed, packed)


# ----------------------------------------------------------------------------
# Synthetic parameters + pure-JAX reference for validation
# ----------------------------------------------------------------------------
def init_params(key, embed_size, hidden_size):
    """Deterministic synthetic parameters; weights stored as (in, out)."""
    E, H = embed_size, hidden_size

    def uni(key, shape, fan_in):
        bound = 1.0 / jnp.sqrt(jnp.float32(fan_in))
        return jax.random.uniform(key, shape, jnp.float32, -bound, bound)

    ks = jax.random.split(key, 20)
    p = {}
    p["wih"] = uni(ks[0], (2 * E, 4 * H), H)
    p["bih"] = uni(ks[1], (1, 4 * H), H)
    p["whh"] = uni(ks[2], (H, 4 * H), H)
    p["bhh"] = uni(ks[3], (1, 4 * H), H)
    p["wf"] = uni(ks[4], (E, H), E)      # Conv1d(E, H, 1)
    p["bf"] = uni(ks[5], (1, H), E)
    p["we"] = uni(ks[6], (H, H), H)      # Conv1d(H, H, 1)
    p["be"] = uni(ks[7], (1, H), H)
    p["wlh"] = uni(ks[8], (H, H), H)     # Linear(H, H)
    p["blh"] = uni(ks[9], (1, H), H)
    p["weh"] = uni(ks[10], (H, H), H)    # Linear(H, H)
    p["beh"] = uni(ks[11], (1, H), H)
    p["wc"] = uni(ks[12], (1, H), H)     # Conv1d(H, 1, 1)
    p["bc"] = uni(ks[13], (1, 1), H)
    p["wout"] = uni(ks[14], (H, H), H)   # Linear(H, H)
    p["bout"] = uni(ks[15], (1, H), H)
    return p


def lstm_att_reference(input_feat, features_ncl, prev_word, states, params):
    """Pure-JAX reference mirroring the PyTorch module."""
    B = input_feat.shape[0]
    H = params["whh"].shape[0]
    if states is None:
        h0 = jnp.zeros((B, H), input_feat.dtype)
        c0 = jnp.zeros((B, H), input_feat.dtype)
    else:
        h0, c0 = states
    x = jnp.concatenate([input_feat, prev_word], axis=1)
    gates = x @ params["wih"] + params["bih"] + h0 @ params["whh"] + params["bhh"]
    i = jax.nn.sigmoid(gates[:, 0 * H:1 * H])
    f = jax.nn.sigmoid(gates[:, 1 * H:2 * H])
    g = jnp.tanh(gates[:, 2 * H:3 * H])
    o = jax.nn.sigmoid(gates[:, 3 * H:4 * H])
    c = f * c0 + i * g
    h = o * jnp.tanh(c)

    feats = jnp.transpose(features_ncl, (0, 2, 1))                       # (B, L, E)
    feat_h = jax.nn.relu(jnp.einsum("ble,eh->blh", feats, params["wf"]) + params["bf"])
    feat_embed = jnp.einsum("blh,hk->blk", feat_h, params["we"]) + params["be"]
    hid = jnp.tanh(h @ params["wlh"] + params["blh"])
    hid_embed = hid @ params["weh"] + params["beh"]
    merged = jnp.tanh(feat_embed + hid_embed[:, None, :])
    logits = jnp.sum(merged * params["wc"][0][None, None, :], axis=-1) + params["bc"][0, 0]
    att = jax.nn.softmax(logits, axis=1)
    v = jnp.einsum("bl,blh->bh", att, feat_h) + hid
    out = jnp.tanh(v @ params["wout"] + params["bout"])
    return out, (h, c), att


if __name__ == "__main__":
    B, E, H, L = 2, 16, 32, 16

    key = jax.random.PRNGKey(0)
    k_in, k_feat, k_prev, k_par = jax.random.split(key, 4)
    input_feat = jax.random.normal(k_in, (B, E), jnp.float32)
    features = jax.random.normal(k_feat, (B, E, L), jnp.float32)   # PyTorch NCL
    prev_word = jax.random.normal(k_prev, (B, E), jnp.float32)
    params = init_params(k_par, E, H)
    packed = pack_params(params)

    out, (h, c), att = lstm_att_forward(input_feat, features, prev_word, None, packed)
    jax.block_until_ready((out, h, c, att))

    # correctness check vs. pure-JAX reference
    r_out, (r_h, r_c), r_att = lstm_att_reference(
        input_feat, features, prev_word, None, params)
    assert jnp.allclose(out, r_out, atol=2e-5), "out mismatch"
    assert jnp.allclose(h, r_h, atol=2e-5), "h mismatch"
    assert jnp.allclose(c, r_c, atol=2e-5), "c mismatch"
    assert jnp.allclose(att, r_att, atol=2e-5), "att mismatch"
    assert abs(float(jnp.sum(att)) - B) < 1e-4, "softmax rows should sum to 1"

    print("KERNEL_OK")
</pallas_src>

<mosaic_0001>
module attributes {stable_mosaic.version = 11 : i64} {
  func.func @feature_proj_kernel(%arg0: memref<32x16xf32, #tpu.memory_space<vmem>>, %arg1: memref<16x32xf32, #tpu.memory_space<vmem>>, %arg2: memref<32x32xf32, #tpu.memory_space<vmem>>, %arg3: memref<1x64xf32, #tpu.memory_space<vmem>>, %arg4: memref<32x64xf32, #tpu.memory_space<vmem>>) attributes {dimension_semantics = [], scalar_prefetch = 0 : i64, scratch_operands = 0 : i64, tpu.core_type = #tpu.core_type<tc>} {
    %c0 = arith.constant 0 : index
    %c0_0 = arith.constant 0 : index
    %0 = vector.load %arg0[%c0, %c0_0] : memref<32x16xf32, #tpu.memory_space<vmem>>, vector<32x16xf32>
    %c0_1 = arith.constant 0 : index
    %c0_2 = arith.constant 0 : index
    %1 = vector.load %arg1[%c0_1, %c0_2] : memref<16x32xf32, #tpu.memory_space<vmem>>, vector<16x32xf32>
    %cst = arith.constant dense<0.000000e+00> : vector<32x32xf32>
    %2 = tpu.matmul %0, %1, %cst {dimension_numbers = #tpu.dot_dimension_numbers<[1], [0], [0], [1], [0, 0, 1, 1], [], []>} : vector<32x16xf32>, vector<16x32xf32>, vector<32x32xf32> -> vector<32x32xf32>
    %c0_3 = arith.constant 0 : index
    %c0_4 = arith.constant 0 : index
    %3 = vector.load %arg3[%c0_3, %c0_4] : memref<1x64xf32, #tpu.memory_space<vmem>>, vector<1x32xf32>
    %4 = vector.broadcast %3 : vector<1x32xf32> to vector<32x32xf32>
    %5 = arith.addf %2, %4 : vector<32x32xf32>
    %cst_5 = arith.constant 0.000000e+00 : f32
    %6 = vector.broadcast %cst_5 : f32 to vector<32x32xf32>
    %7 = arith.maximumf %5, %6 : vector<32x32xf32>
    %c0_6 = arith.constant 0 : index
    %c0_7 = arith.constant 0 : index
    %8 = vector.load %arg2[%c0_6, %c0_7] : memref<32x32xf32, #tpu.memory_space<vmem>>, vector<32x32xf32>
    %cst_8 = arith.constant dense<0.000000e+00> : vector<32x32xf32>
    %9 = tpu.matmul %7, %8, %cst_8 {dimension_numbers = #tpu.dot_dimension_numbers<[1], [0], [0], [1], [0, 0, 1, 1], [], []>} : vector<32x32xf32>, vector<32x32xf32>, vector<32x32xf32> -> vector<32x32xf32>
    %c0_9 = arith.constant 0 : index
    %c32 = arith.constant 32 : index
    %10 = vector.load %arg3[%c0_9, %c32] : memref<1x64xf32, #tpu.memory_space<vmem>>, vector<1x32xf32>
    %11 = vector.broadcast %10 : vector<1x32xf32> to vector<32x32xf32>
    %12 = arith.addf %9, %11 : vector<32x32xf32>
    %c0_10 = arith.constant 0 : index
    %c0_11 = arith.constant 0 : index
    %13 = vector.load %arg4[%c0_10, %c0_11] : memref<32x64xf32, #tpu.memory_space<vmem>>, vector<32x32xf32>
    tpu.vector_store %arg4[%c0_10, %c0_11], %7 {strides = array<i32>} : memref<32x64xf32, #tpu.memory_space<vmem>>, vector<32x32xf32>,
    %c0_12 = arith.constant 0 : index
    %c32_13 = arith.constant 32 : index
    %14 = vector.load %arg4[%c0_12, %c32_13] : memref<32x64xf32, #tpu.memory_space<vmem>>, vector<32x32xf32>
    tpu.vector_store %arg4[%c0_12, %c32_13], %12 {strides = array<i32>} : memref<32x64xf32, #tpu.memory_space<vmem>>, vector<32x32xf32>,
    return
  }
}

</mosaic_0001>

<llo_original>
// kernel: tpu_custom_call.1
$region0: #{tpu_custom_call.1}
  #allocation0 [shape = 'u32[]', space=smem, size = 0x4, offset = 0x4, fixed_abs, tag = 'smem constant byte address 0x4 - core index']
  #allocation1 [shape = 'u32[144,128]{1,0:T(1,128)}', space=vmem, size = 0x12000, scoped, tag = 'internal scratch']
  %s0 = inlined_call_operand.vmem [shape: f32[32,16], index: 0, kind: input, shape index: {}]
  %s1 = inlined_call_operand.vmem [shape: f32[16,32], index: 1, kind: input, shape index: {}]
  %s2 = inlined_call_operand.vmem [shape: f32[32,32], index: 2, kind: input, shape index: {}]
  %s3 = inlined_call_operand.vmem [shape: f32[1,64], index: 3, kind: input, shape index: {}]
  %s4 = inlined_call_operand.hbm [shape: f32[32,64], index: 4, kind: output, shape index: {}]
  %s5 = sld [smem:[#allocation0]]
  $region26: #{tpu_custom_call.1} parent=0
    _
  %s7 = ssub.s32 1, %s5
  %s8 = scalar_select 0, %s7, %s5
  $region1: #{tpu_custom_call.1} parent=0
    #allocation2 [shape = 'u8[16384]{0}', space=vmem, size = 0x4000, scoped, tag = 'output window, operand 0, single buffered']
    #allocation3 [shape = 's32[1]{0}', space=sflag, size = 0x4, scoped, tag = 'scoped memory for tpu_custom_call.1']
    %9 = vsyncpa [#allocation3], 0
    // Predicated region
    $region2: #{tpu_custom_call.1} parent=1 // pred_check
      _
    $region3: #{tpu_custom_call.1} parent=1 // pred_check_branch
      %11 = sbr.rel (0) target = $region5
    $region4: #{tpu_custom_call.1} parent=1 // pred_region
      _
    $region5: #{tpu_custom_call.1} parent=1 // pred_fallthru
      _
    // Predicated region
    $region6: #{tpu_custom_call.1} parent=1 // pred_check
      _
    $region7: #{tpu_custom_call.1} parent=1 // pred_check_branch
      %13 = sbr.rel (0) target = $region9
    $region8: #{tpu_custom_call.1} parent=1 // pred_region
      _
    $region9: #{tpu_custom_call.1} parent=1 // pred_fallthru
      _
    // Predicated region
    $region10: #{tpu_custom_call.1} parent=1 // pred_check
      _
    $region11: #{tpu_custom_call.1} parent=1 // pred_check_branch
      %15 = sbr.rel (0) target = $region13
    $region12: #{tpu_custom_call.1} parent=1 // pred_region
      _
    $region13: #{tpu_custom_call.1} parent=1 // pred_fallthru
      _
    // Predicated region
    $region14: #{tpu_custom_call.1} parent=1 // pred_check
      _
    $region15: #{tpu_custom_call.1} parent=1 // pred_check_branch
      %17 = sbr.rel (0) target = $region17
    $region16: #{tpu_custom_call.1} parent=1 // pred_region
      _
    $region17: #{tpu_custom_call.1} parent=1 // pred_fallthru
      _
    %v18 = vld [vmem:[%s0] sm:$0xff]
    %v19 = vld [vmem:[%s0 + $0x8] sm:$0xff]
    %v20 = vld [vmem:[%s0 + $0x10] sm:$0xff]
    %v21 = vld [vmem:[%s0 + $0x18] sm:$0xff]
    %v22 = vld [vmem:[%s1] sm:$0xff]
    %v23 = vld [vmem:[%s1 + $0x8] sm:$0xff]
    %v24 = vld [vmem:[%s3] sm:$0x1]
    %v26 = vlaneseq
    %v27 = vshrl.u32 %v26, 7
    %v28 = vsub.s32 0, %v27
    %v29 = vrot.slane %v24, %v28
    %vm31 = vcmask 130048
    %v33 = vsel %vm31, %v18, 0
    %v36 = vsel %vm31, %v19, 0
    %v39 = vsel %vm31, %v20, 0
    %v42 = vsel %vm31, %v21, 0
    %44 = vmatprep.subr.mxu0 0.0
    %45 = vmatpush1.msra.mxu0 0.0
    %46 = vmatprep.subr.mxu0 0.0
    %47 = vmatpush1.msra.mxu0 0.0
    %48 = vmatprep.subr.mxu0 0.0
    %49 = vmatpush1.msra.mxu0 0.0
    %50 = vmatprep.subr.mxu0 0.0
    %51 = vmatpush1.msra.mxu0 0.0
    %52 = vmatprep.subr.mxu0 0.0
    %53 = vmatpush1.msra.mxu0 0.0
    %54 = vmatprep.subr.mxu0 0.0
    %55 = vmatpush1.msra.mxu0 0.0
    %56 = vmatprep.subr.mxu0 0.0
    %57 = vmatpush1.msra.mxu0 0.0
    %58 = vmatprep.subr.mxu0 0.0
    %59 = vmatpush1.msra.mxu0 0.0
    %60 = vmatprep.subr.mxu0 0.0
    %61 = vmatpush1.msra.mxu0 0.0
    %62 = vmatprep.subr.mxu0 0.0
    %63 = vmatpush1.msra.mxu0 0.0
    %64 = vmatprep.subr.mxu0 0.0
    %65 = vmatpush1.msra.mxu0 0.0
    %66 = vmatprep.subr.mxu0 0.0
    %67 = vmatpush1.msra.mxu0 0.0
    %68 = vmatprep.subr.mxu0 0.0
    %69 = vmatpush1.msra.mxu0 0.0
    %70 = vmatprep.subr.mxu0 0.0
    %71 = vmatpush1.msra.mxu0 0.0
    %72 = vmatprep.subr.mxu0 0.0
    %73 = vmatpush1.msra.mxu0 %v23
    %74 = vmatprep.subr.mxu0 0.0
    %75 = vmatpush1.msra.mxu0 %v22
    %76 = vmatprep.subr.mxu0 0.0
    %77 = vmatpush2.msra.mxu0 0.0
    %78 = vmatprep.subr.mxu0 0.0
    %79 = vmatpush2.msra.mxu0 0.0
    %80 = vmatprep.subr.mxu0 0.0
    %81 = vmatpush2.msra.mxu0 0.0
    %82 = vmatprep.subr.mxu0 0.0
    %83 = vmatpush2.msra.mxu0 0.0
    %84 = vmatprep.subr.mxu0 0.0
    %85 = vmatpush2.msra.mxu0 0.0
    %86 = vmatprep.subr.mxu0 0.0
    %87 = vmatpush2.msra.mxu0 0.0
    %88 = vmatprep.subr.mxu0 0.0
    %89 = vmatpush2.msra.mxu0 0.0
    %90 = vmatprep.subr.mxu0 0.0
    %91 = vmatpush2.msra.mxu0 0.0
    %92 = vmatprep.subr.mxu0 0.0
    %93 = vmatpush2.msra.mxu0 0.0
    %94 = vmatprep.subr.mxu0 0.0
    %95 = vmatpush2.msra.mxu0 0.0
    %96 = vmatprep.subr.mxu0 0.0
    %97 = vmatpush2.msra.mxu0 0.0
    %98 = vmatprep.subr.mxu0 0.0
    %99 = vmatpush2.msra.mxu0 0.0
    %100 = vmatprep.subr.mxu0 0.0
    %101 = vmatpush2.msra.mxu0 0.0
    %102 = vmatprep.subr.mxu0 0.0
    %103 = vmatpush2.msra.mxu0 0.0
    %104 = vmatprep.subr.mxu0 0.0
    %105 = vmatpush2.msra.mxu0 0.0
    %106 = vmatprep.subr.mxu0 0.0
    %107 = vmatpush2.msra.mxu0 0.0
    %108 = vmatprep.mubr.f32.mxu0 0.0
    %109 = vmatmul.mubr.f32.gmra.mxu0 %v33
    %v110 = vpop.f32.mrf.mxu0
    %v111 = vadd.f32 %v29, %v110
    %v112 = vpop.f32.mrf.mxu0
    %113 = vmatprep.mubr.f32.mxu0 0.0
    %114 = vmatmul.mubr.f32.gmra.mxu0 %v36
    %v115 = vpop.f32.mrf.mxu0
    %v116 = vadd.f32 %v29, %v115
    %v117 = vpop.f32.mrf.mxu0
    %118 = vmatprep.mubr.f32.mxu0 0.0
    %119 = vmatmul.mubr.f32.gmra.mxu0 %v39
    %v120 = vpop.f32.mrf.mxu0
    %v121 = vadd.f32 %v29, %v120
    %v122 = vpop.f32.mrf.mxu0
    %123 = vmatprep.mubr.f32.mxu0 0.0
    %124 = vmatmul.mubr.f32.gmra.mxu0 %v42
    %v125 = vpop.f32.mrf.mxu0
    %v126 = vadd.f32 %v29, %v125
    %v127 = vpop.f32.mrf.mxu0
    %128 = vdwg.mxu0
    %v129 = vmax.f32 %v111, 0.0
    %v130 = vmax.f32 %v116, 0.0
    %v131 = vmax.f32 %v121, 0.0
    %v132 = vmax.f32 %v126, 0.0
    %v133 = vld [vmem:[%s2] sm:$0xff]
    %v134 = vld [vmem:[%s2 + $0x8] sm:$0xff]
    %v135 = vld [vmem:[%s2 + $0x10] sm:$0xff]
    %v136 = vld [vmem:[%s2 + $0x18] sm:$0xff]
    %137 = vrot.lane.b32.xlu0 %v29, 96
    %v138 = vpop.permute.xlu0 %137
    %vm140 = vcmask 261120
    %v142 = vsel %vm140, %v129, 0
    %v145 = vsel %vm140, %v130, 0
    %v148 = vsel %vm140, %v131, 0
    %v151 = vsel %vm140, %v132, 0
    %153 = vmatprep.subr.mxu0 0.0
    %154 = vmatpush1.msra.mxu0 0.0
    %155 = vmatprep.subr.mxu0 0.0
    %156 = vmatpush1.msra.mxu0 0.0
    %157 = vmatprep.subr.mxu0 0.0
    %158 = vmatpush1.msra.mxu0 0.0
    %159 = vmatprep.subr.mxu0 0.0
    %160 = vmatpush1.msra.mxu0 0.0
    %161 = vmatprep.subr.mxu0 0.0
    %162 = vmatpush1.msra.mxu0 0.0
    %163 = vmatprep.subr.mxu0 0.0
    %164 = vmatpush1.msra.mxu0 0.0
    %165 = vmatprep.subr.mxu0 0.0
    %166 = vmatpush1.msra.mxu0 0.0
    %167 = vmatprep.subr.mxu0 0.0
    %168 = vmatpush1.msra.mxu0 0.0
    %169 = vmatprep.subr.mxu0 0.0
    %170 = vmatpush1.msra.mxu0 0.0
    %171 = vmatprep.subr.mxu0 0.0
    %172 = vmatpush1.msra.mxu0 0.0
    %173 = vmatprep.subr.mxu0 0.0
    %174 = vmatpush1.msra.mxu0 0.0
    %175 = vmatprep.subr.mxu0 0.0
    %176 = vmatpush1.msra.mxu0 0.0
    %177 = vmatprep.subr.mxu0 0.0
    %178 = vmatpush1.msra.mxu0 %v136
    %179 = vmatprep.subr.mxu0 0.0
    %180 = vmatpush1.msra.mxu0 %v135
    %181 = vmatprep.subr.mxu0 0.0
    %182 = vmatpush1.msra.mxu0 %v134
    %183 = vmatprep.subr.mxu0 0.0
    %184 = vmatpush1.msra.mxu0 %v133
    %185 = vmatprep.subr.mxu0 0.0
    %186 = vmatpush2.msra.mxu0 0.0
    %187 = vmatprep.subr.mxu0 0.0
    %188 = vmatpush2.msra.mxu0 0.0
    %189 = vmatprep.subr.mxu0 0.0
    %190 = vmatpush2.msra.mxu0 0.0
    %191 = vmatprep.subr.mxu0 0.0
    %192 = vmatpush2.msra.mxu0 0.0
    %193 = vmatprep.subr.mxu0 0.0
    %194 = vmatpush2.msra.mxu0 0.0
    %195 = vmatprep.subr.mxu0 0.0
    %196 = vmatpush2.msra.mxu0 0.0
    %197 = vmatprep.subr.mxu0 0.0
    %198 = vmatpush2.msra.mxu0 0.0
    %199 = vmatprep.subr.mxu0 0.0
    %200 = vmatpush2.msra.mxu0 0.0
    %201 = vmatprep.subr.mxu0 0.0
    %202 = vmatpush2.msra.mxu0 0.0
    %203 = vmatprep.subr.mxu0 0.0
    %204 = vmatpush2.msra.mxu0 0.0
    %205 = vmatprep.subr.mxu0 0.0
    %206 = vmatpush2.msra.mxu0 0.0
    %207 = vmatprep.subr.mxu0 0.0
    %208 = vmatpush2.msra.mxu0 0.0
    %209 = vmatprep.subr.mxu0 0.0
    %210 = vmatpush2.msra.mxu0 0.0
    %211 = vmatprep.subr.mxu0 0.0
    %212 = vmatpush2.msra.mxu0 0.0
    %213 = vmatprep.subr.mxu0 0.0
    %214 = vmatpush2.msra.mxu0 0.0
    %215 = vmatprep.subr.mxu0 0.0
    %216 = vmatpush2.msra.mxu0 0.0
    %217 = vmatprep.mubr.f32.mxu0 0.0
    %218 = vmatmul.mubr.f32.gmra.mxu0 %v142
    %v219 = vpop.f32.mrf.mxu0
    %v220 = vadd.f32 %v138, %v219
    %v221 = vpop.f32.mrf.mxu0
    %222 = vmatprep.mubr.f32.mxu0 0.0
    %223 = vmatmul.mubr.f32.gmra.mxu0 %v145
    %v224 = vpop.f32.mrf.mxu0
    %v225 = vadd.f32 %v138, %v224
    %v226 = vpop.f32.mrf.mxu0
    %227 = vmatprep.mubr.f32.mxu0 0.0
    %228 = vmatmul.mubr.f32.gmra.mxu0 %v148
    %v229 = vpop.f32.mrf.mxu0
    %v230 = vadd.f32 %v138, %v229
    %v231 = vpop.f32.mrf.mxu0
    %232 = vmatprep.mubr.f32.mxu0 0.0
    %233 = vmatmul.mubr.f32.gmra.mxu0 %v151
    %v234 = vpop.f32.mrf.mxu0
    %v235 = vadd.f32 %v138, %v234
    %v236 = vpop.f32.mrf.mxu0
    %237 = vdwg.mxu0
    %238 = vst.msk [vmem:[#allocation2] sm:$0xff] %vm140, %v129
    %239 = vst.msk [vmem:[#allocation2 + $0x8] sm:$0xff] %vm140, %v130
    %240 = vst.msk [vmem:[#allocation2 + $0x10] sm:$0xff] %vm140, %v131
    %241 = vst.msk [vmem:[#allocation2 + $0x18] sm:$0xff] %vm140, %v132
    %246 = vrot.lane.b32.xlu0 %v220, 32
    %v247 = vpop.permute.xlu0 %246
    %248 = vrot.lane.b32.xlu0 %v225, 32
    %v249 = vpop.permute.xlu0 %248
    %250 = vrot.lane.b32.xlu0 %v230, 32
    %v251 = vpop.permute.xlu0 %250
    %252 = vrot.lane.b32.xlu0 %v235, 32
    %v253 = vpop.permute.xlu0 %252
    %vm258 = vcmask 523520
    %259 = vst.msk [vmem:[#allocation2] sm:$0xff] %vm258, %v247
    %260 = vst.msk [vmem:[#allocation2 + $0x8] sm:$0xff] %vm258, %v249
    %261 = vst.msk [vmem:[#allocation2 + $0x10] sm:$0xff] %vm258, %v251
    %262 = vst.msk [vmem:[#allocation2 + $0x18] sm:$0xff] %vm258, %v253
    // Predicated region
    $region18: #{tpu_custom_call.1} parent=1 // pred_check
      _
    $region19: #{tpu_custom_call.1} parent=1 // pred_check_branch
      %264 = sbr.rel (0) target = $region21
    $region20: #{tpu_custom_call.1} parent=1 // pred_region
      %s266 = ssub.s32 512, 512
      %267 = vsyncadd [#allocation3], %s266
      %s268 = sshll.u32 [#allocation2], 4
      %s269 = int_to_ptr.vmem [resolvable:$true] %s268
      %274 = dma.vmem_to_hbm [thread:$0]  %s269, 512, %s4, [#allocation3], 128, 128, 8
    $region21: #{tpu_custom_call.1} parent=1 // pred_fallthru
      _
    // Predicated region
    $region22: #{tpu_custom_call.1} parent=1 // pred_check
      _
    $region23: #{tpu_custom_call.1} parent=1 // pred_check_branch
      %276 = sbr.rel (0) target = $region25
    $region24: #{tpu_custom_call.1} parent=1 // pred_region
      %277 = dma.done [#allocation3], 512
    $region25: #{tpu_custom_call.1} parent=1 // pred_fallthru
      _
    %278 = vsyncpa [#allocation3], 1

</llo_original>
